<compile_context>
chip_gen: v7x
topology: tpu7x:2x2x1
jax: 0.10.0
libtpu: 0.0.40
codegen_flags: <defaults>
</compile_context>

<pallas_src>
import functools

import jax
import jax.numpy as jnp
from jax import lax
from jax.experimental import pallas as pl
from jax.experimental.pallas import tpu as pltpu


def _round_up(x, m):
    return ((x + m - 1) // m) * m


def _sublane_multiple(dtype):
    itemsize = jnp.dtype(dtype).itemsize
    if itemsize >= 4:
        return 8
    if itemsize == 2:
        return 16
    return 32


def _vmem_capacity_bytes():
    try:
        return int(pltpu.get_tpu_info().vmem_capacity_bytes)
    except Exception:
        return 64 << 20  # conservative (v7x-sized) fallback


def _ce_label_smooth_kernel(x_ref, t_ref, o_ref, acc_ref, *,
                            epsilon, num_classes, n_total, tile_n, t_steps):
    p_idx = pl.program_id(0)          # parallel slice
    t_idx = pl.program_id(1)          # tile within slice ("arbitrary")

    @pl.when(t_idx == 0)
    def _():
        acc_ref[...] = jnp.zeros_like(acc_ref)

    x = x_ref[...].astype(jnp.float32)            # (TILE_N, C), upcast in-kernel
    labels = t_ref[...]                           # (TILE_N, 1) int32

    # Row max (only remaining XLU lane reduce); center for numerical stability.
    m = jnp.max(x, axis=1, keepdims=True)         # (TILE_N, 1)
    xm = x - m                                    # VPU
    p = jnp.exp(xm)                               # EUP

    # Lane sums offloaded to the idle MXU as (TILE_N,C)x(C,1) matvecs.
    ones = jnp.ones((x.shape[1], 1), jnp.float32)
    sum_exp = jnp.dot(p, ones, preferred_element_type=jnp.float32)      # (TILE_N,1)

    # Fused smoothed-target weighted reduce: w_j = eps/C + (1-eps)*[j==t_i],
    # sum_j w_j == 1, so  loss_i = log(sum_exp_i) - sum_j w_ij * (x_ij - m_i).
    eps_c = epsilon / float(num_classes)
    class_ids = lax.broadcasted_iota(jnp.int32, x.shape, 1)
    w = jnp.where(class_ids == labels, 1.0 - epsilon + eps_c, eps_c)    # VPU select
    wsum = jnp.dot(w * xm, ones, preferred_element_type=jnp.float32)    # (TILE_N,1)

    loss_rows = jnp.log(sum_exp) - wsum                                 # (TILE_N,1)

    # Mask rows past N (ragged last tile / clamped duplicate blocks); where()
    # selects 0.0 so Inf/NaN from garbage padding cannot leak into the sum.
    block = p_idx * t_steps + t_idx
    row_ids = block * tile_n + lax.broadcasted_iota(jnp.int32, (tile_n, 1), 0)
    acc_ref[...] += jnp.where(row_ids < n_total, loss_rows, 0.0)

    @pl.when(t_idx == t_steps - 1)
    def _():
        # One sublane reduce per parallel slice; divide-by-N happens in wrapper.
        o_ref[...] = jnp.sum(acc_ref[...]).reshape(1, 1, 1)


def _choose_tile_n(n, c, dtype):
    """Largest batch tile whose double-buffered tiles fit the VMEM budget."""
    sub = _sublane_multiple(dtype)
    itemsize = jnp.dtype(dtype).itemsize
    c_pad = _round_up(c, 128)
    vmem_cap = _vmem_capacity_bytes()
    # ~32 MiB of pipelined buffers on 128 MiB parts, ~24 MiB on v7x (64 MiB).
    budget = min(32 << 20, (vmem_cap * 3) // 8)
    # 2x logits buffers + 2x lane-padded label buffers + f32 row accumulator.
    per_row = 2 * c_pad * itemsize + 2 * 128 * 4 + 128 * 4
    cap = max(sub, budget // per_row)
    cap = min(cap, 2048)                  # amortize ~0.35us/grid-step overhead
    if cap >= n:
        return n                          # block dim == full array dim is legal
    return max((min(cap, n) // sub) * sub, sub)


def cross_entropy_label_smooth(inputs, targets, num_classes, epsilon=0.1,
                               tile_n=None):
    """inputs: (N, C) float logits; targets: (N,) int labels.

    Returns scalar f32 loss == sum(mean(-smoothed_onehot * log_softmax(x), 0)).
    """
    n, c = inputs.shape
    assert c == num_classes
    t2d = targets.astype(jnp.int32).reshape(n, 1)

    if tile_n is None:
        tile_n = _choose_tile_n(n, c, inputs.dtype)
    tile_n = int(min(tile_n, n))

    num_blocks = pl.cdiv(n, tile_n)
    p_slices = 2 if num_blocks >= 2 else 1            # shardable across v7x TCs
    t_steps = pl.cdiv(num_blocks, p_slices)
    last_block = num_blocks - 1

    def block_index(p, t):
        # Clamp so the (possibly duplicated) trailing step of the second slice
        # never indexes past the array; its rows are fully masked in-kernel.
        return jnp.minimum(p * t_steps + t, last_block)

    x_spec = pl.BlockSpec((tile_n, c), lambda p, t: (block_index(p, t), 0))
    t_spec = pl.BlockSpec((tile_n, 1), lambda p, t: (block_index(p, t), 0))
    o_spec = pl.BlockSpec((1, 1, 1), lambda p, t: (p, 0, 0))

    # VMEM accounting (labels / accumulator are lane-padded to 128 lanes).
    itemsize = jnp.dtype(inputs.dtype).itemsize
    rows_pad = _round_up(tile_n, 32)
    c_pad = _round_up(c, 128)
    vmem_need = (2 * rows_pad * c_pad * itemsize      # logits double buffer
                 + 2 * rows_pad * 128 * 4             # label double buffer
                 + rows_pad * 128 * 4                 # accumulator scratch
                 + (2 << 20))                         # slack
    vmem_cap = _vmem_capacity_bytes()
    vmem_limit = int(min(max(vmem_need, 16 << 20), (vmem_cap * 3) // 4))

    kernel = functools.partial(
        _ce_label_smooth_kernel,
        epsilon=float(epsilon),
        num_classes=int(num_classes),
        n_total=int(n),
        tile_n=int(tile_n),
        t_steps=int(t_steps),
    )

    partials = pl.pallas_call(
        kernel,
        out_shape=jax.ShapeDtypeStruct((p_slices, 1, 1), jnp.float32),
        grid=(p_slices, t_steps),
        in_specs=[x_spec, t_spec],
        out_specs=o_spec,
        scratch_shapes=[pltpu.VMEM((tile_n, 1), jnp.float32)],
        compiler_params=pltpu.CompilerParams(
            dimension_semantics=("parallel", "arbitrary"),
            vmem_limit_bytes=vmem_limit,
        ),
    )(inputs, t2d)
    return jnp.sum(partials) / jnp.float32(n)


def _reference(inputs, targets, num_classes, epsilon=0.1):
    log_probs = jax.nn.log_softmax(inputs.astype(jnp.float32), axis=1)
    onehot = jax.nn.one_hot(targets, num_classes, dtype=jnp.float32)
    smoothed = (1.0 - epsilon) * onehot + epsilon / num_classes
    return jnp.sum(jnp.mean(-smoothed * log_probs, axis=0))


if __name__ == "__main__":
    key = jax.random.PRNGKey(0)
    keys = jax.random.split(key, 8)
    epsilon = 0.1

    # Case 1: f32 logits, single full tile.
    batch, num_classes = 8, 128
    logits = jax.random.normal(keys[0], (batch, num_classes), dtype=jnp.float32)
    labels = jax.random.randint(keys[1], (batch,), 0, num_classes, dtype=jnp.int32)
    loss = cross_entropy_label_smooth(logits, labels, num_classes, epsilon)
    jax.block_until_ready(loss)
    ref = _reference(logits, labels, num_classes, epsilon)
    assert jnp.allclose(loss, ref, rtol=2e-4, atol=2e-4), (loss, ref)

    # Case 2: bf16 logits stored in HBM, upcast in-kernel (full 12-row tile).
    batch2 = 12
    logits2 = jax.random.normal(keys[2], (batch2, num_classes),
                                dtype=jnp.float32).astype(jnp.bfloat16)
    labels2 = jax.random.randint(keys[3], (batch2,), 0, num_classes, dtype=jnp.int32)
    loss2 = cross_entropy_label_smooth(logits2, labels2, num_classes, epsilon)
    jax.block_until_ready(loss2)
    ref2 = _reference(logits2, labels2, num_classes, epsilon)
    assert jnp.allclose(loss2, ref2, rtol=2e-4, atol=2e-4), (loss2, ref2)

    # Case 3: multi-tile (parallel x arbitrary) path with an odd block count
    # (exercises the VMEM row accumulator and the clamped duplicate block).
    batch3, classes3 = 40, 256
    logits3 = jax.random.normal(keys[4], (batch3, classes3), dtype=jnp.float32)
    labels3 = jax.random.randint(keys[5], (batch3,), 0, classes3, dtype=jnp.int32)
    loss3 = cross_entropy_label_smooth(logits3, labels3, classes3, epsilon, tile_n=8)
    jax.block_until_ready(loss3)
    ref3 = _reference(logits3, labels3, classes3, epsilon)
    assert jnp.allclose(loss3, ref3, rtol=2e-4, atol=2e-4), (loss3, ref3)

    # Case 4: ragged last tile (rows past N masked inside the kernel).
    batch4 = 20
    logits4 = jax.random.normal(keys[6], (batch4, num_classes), dtype=jnp.float32)
    labels4 = jax.random.randint(keys[7], (batch4,), 0, num_classes, dtype=jnp.int32)
    loss4 = cross_entropy_label_smooth(logits4, labels4, num_classes, epsilon, tile_n=16)
    jax.block_until_ready(loss4)
    ref4 = _reference(logits4, labels4, num_classes, epsilon)
    assert jnp.allclose(loss4, ref4, rtol=2e-4, atol=2e-4), (loss4, ref4)

    print("KERNEL_OK")
</pallas_src>

<mosaic_0001>
module attributes {stable_mosaic.version = 11 : i64} {
  func.func @_ce_label_smooth_kernel(%arg0: i32, %arg1: i32, %arg2: memref<8x128xf32, #tpu.memory_space<vmem>>, %arg3: memref<8x1xi32, #tpu.memory_space<vmem>>, %arg4: memref<1x1x1xf32, #tpu.memory_space<vmem>>, %arg5: memref<8x1xf32, #tpu.memory_space<vmem>>) attributes {dimension_semantics = [#tpu.dimension_semantics<parallel>, #tpu.dimension_semantics<arbitrary>], iteration_bounds = array<i64: 1, 1>, scalar_prefetch = 0 : i64, scratch_operands = 1 : i64, tpu.core_type = #tpu.core_type<tc>, window_params = [{transform_indices = @transform_0, window_bounds = array<i64: 8, 128>}, {transform_indices = @transform_1, window_bounds = array<i64: 8, 1>}, {transform_indices = @transform_2, window_bounds = array<i64: 1, 1, 1>}]} {
    %c0_i32 = arith.constant 0 : i32
    %0 = arith.cmpi eq, %arg1, %c0_i32 : i32
    %1 = arith.extui %0 : i1 to i32
    %c0_i32_0 = arith.constant 0 : i32
    %2 = arith.cmpi ne, %1, %c0_i32_0 : i32
    scf.if %2 {
      %cst_17 = arith.constant 0.000000e+00 : f32
      %38 = vector.broadcast %cst_17 : f32 to vector<8x1xf32>
      %c0_18 = arith.constant 0 : index
      %c0_19 = arith.constant 0 : index
      %39 = vector.load %arg5[%c0_18, %c0_19] : memref<8x1xf32, #tpu.memory_space<vmem>>, vector<8x1xf32>
      tpu.vector_store %arg5[%c0_18, %c0_19], %38 {strides = array<i32>} : memref<8x1xf32, #tpu.memory_space<vmem>>, vector<8x1xf32>,
    } else {
    }
    %c0 = arith.constant 0 : index
    %c0_1 = arith.constant 0 : index
    %3 = vector.load %arg2[%c0, %c0_1] : memref<8x128xf32, #tpu.memory_space<vmem>>, vector<8x128xf32>
    %c0_2 = arith.constant 0 : index
    %c0_3 = arith.constant 0 : index
    %4 = vector.load %arg3[%c0_2, %c0_3] : memref<8x1xi32, #tpu.memory_space<vmem>>, vector<8x1xi32>
    %cst = arith.constant dense<0xFF800000> : vector<8xf32>
    %5 = vector.multi_reduction <maximumf>, %3, %cst [1] : vector<8x128xf32> to vector<8xf32>
    %6 = vector.shape_cast %5 : vector<8xf32> to vector<8x1xf32>
    %7 = vector.broadcast %6 : vector<8x1xf32> to vector<8x128xf32>
    %8 = arith.subf %3, %7 : vector<8x128xf32>
    %9 = math.exp %8 : vector<8x128xf32>
    %cst_4 = arith.constant 1.000000e+00 : f32
    %10 = vector.broadcast %cst_4 : f32 to vector<128x1xf32>
    %cst_5 = arith.constant dense<0.000000e+00> : vector<8x1xf32>
    %11 = tpu.matmul %9, %10, %cst_5 {dimension_numbers = #tpu.dot_dimension_numbers<[1], [0], [0], [1], [0, 0, 1, 1], [], []>} : vector<8x128xf32>, vector<128x1xf32>, vector<8x1xf32> -> vector<8x1xf32>
    %12 = tpu.iota {dimensions = array<i32: 1>} : vector<8x128xi32>
    %13 = vector.broadcast %4 : vector<8x1xi32> to vector<8x128xi32>
    %14 = arith.cmpi eq, %12, %13 : vector<8x128xi32>
    %cst_6 = arith.constant 0.900781273 : f32
    %cst_7 = arith.constant 7.812500e-04 : f32
    %15 = vector.broadcast %cst_6 : f32 to vector<8x128xf32>
    %16 = vector.broadcast %cst_7 : f32 to vector<8x128xf32>
    %17 = arith.select %14, %15, %16 : vector<8x128xi1>, vector<8x128xf32>
    %18 = arith.mulf %17, %8 : vector<8x128xf32>
    %cst_8 = arith.constant dense<0.000000e+00> : vector<8x1xf32>
    %19 = tpu.matmul %18, %10, %cst_8 {dimension_numbers = #tpu.dot_dimension_numbers<[1], [0], [0], [1], [0, 0, 1, 1], [], []>} : vector<8x128xf32>, vector<128x1xf32>, vector<8x1xf32> -> vector<8x1xf32>
    %20 = math.log %11 : vector<8x1xf32>
    %21 = arith.subf %20, %19 : vector<8x1xf32>
    %c1_i32 = arith.constant 1 : i32
    %22 = arith.muli %arg0, %c1_i32 : i32
    %23 = arith.addi %22, %arg1 : i32
    %c8_i32 = arith.constant 8 : i32
    %24 = arith.muli %23, %c8_i32 : i32
    %25 = tpu.iota {dimensions = array<i32: 0>} : vector<8x1xi32>
    %26 = vector.broadcast %24 : i32 to vector<8x1xi32>
    %27 = arith.addi %26, %25 : vector<8x1xi32>
    %c0_9 = arith.constant 0 : index
    %c0_10 = arith.constant 0 : index
    %28 = vector.load %arg5[%c0_9, %c0_10] : memref<8x1xf32, #tpu.memory_space<vmem>>, vector<8x1xf32>
    %c8_i32_11 = arith.constant 8 : i32
    %29 = vector.broadcast %c8_i32_11 : i32 to vector<8x1xi32>
    %30 = arith.cmpi slt, %27, %29 : vector<8x1xi32>
    %cst_12 = arith.constant 0.000000e+00 : f32
    %31 = vector.broadcast %cst_12 : f32 to vector<8x1xf32>
    %32 = arith.select %30, %21, %31 : vector<8x1xi1>, vector<8x1xf32>
    %33 = arith.addf %28, %32 : vector<8x1xf32>
    %c0_13 = arith.constant 0 : index
    %c0_14 = arith.constant 0 : index
    %34 = vector.load %arg5[%c0_13, %c0_14] : memref<8x1xf32, #tpu.memory_space<vmem>>, vector<8x1xf32>
    tpu.vector_store %arg5[%c0_13, %c0_14], %33 {strides = array<i32>} : memref<8x1xf32, #tpu.memory_space<vmem>>, vector<8x1xf32>,
    %c0_i32_15 = arith.constant 0 : i32
    %35 = arith.cmpi eq, %arg1, %c0_i32_15 : i32
    %36 = arith.extui %35 : i1 to i32
    %c0_i32_16 = arith.constant 0 : i32
    %37 = arith.cmpi ne, %36, %c0_i32_16 : i32
    scf.if %37 {
      %c0_17 = arith.constant 0 : index
      %c0_18 = arith.constant 0 : index
      %38 = vector.load %arg5[%c0_17, %c0_18] : memref<8x1xf32, #tpu.memory_space<vmem>>, vector<8x1xf32>
      %39 = vector.shape_cast %38 : vector<8x1xf32> to vector<1x8x1xf32>
      %cst_19 = arith.constant dense<0.000000e+00> : vector<1xf32>
      %40 = vector.multi_reduction <add>, %39, %cst_19 [1, 2] : vector<1x8x1xf32> to vector<1xf32>
      %41 = vector.shape_cast %40 : vector<1xf32> to vector<1x1x1xf32>
      %42 = vector.extract %41[0, 0, 0] : f32 from vector<1x1x1xf32>
      %43 = vector.broadcast %42 : f32 to vector<1x1x1xf32>
      %c0_20 = arith.constant 0 : index
      %c0_21 = arith.constant 0 : index
      %c0_22 = arith.constant 0 : index
      %44 = vector.load %arg4[%c0_20, %c0_21, %c0_22] : memref<1x1x1xf32, #tpu.memory_space<vmem>>, vector<1x1x1xf32>
      tpu.vector_store %arg4[%c0_20, %c0_21, %c0_22], %43 {strides = array<i32>} : memref<1x1x1xf32, #tpu.memory_space<vmem>>, vector<1x1x1xf32>,
    } else {
    }
    return
  }
  func.func @transform_0(%arg0: i32, %arg1: i32) -> (i32, i32) {
    %c1_i32 = arith.constant 1 : i32
    %0 = arith.muli %arg0, %c1_i32 : i32
    %1 = arith.addi %0, %arg1 : i32
    %c0_i32 = arith.constant 0 : i32
    %2 = arith.minsi %1, %c0_i32 : i32
    %c0_i32_0 = arith.constant 0 : i32
    %c0_i32_1 = arith.constant 0 : i32
    return %2, %c0_i32_0 : i32, i32
  }
  func.func @transform_1(%arg0: i32, %arg1: i32) -> (i32, i32) {
    %c1_i32 = arith.constant 1 : i32
    %0 = arith.muli %arg0, %c1_i32 : i32
    %1 = arith.addi %0, %arg1 : i32
    %c0_i32 = arith.constant 0 : i32
    %2 = arith.minsi %1, %c0_i32 : i32
    %c0_i32_0 = arith.constant 0 : i32
    %c0_i32_1 = arith.constant 0 : i32
    return %2, %c0_i32_0 : i32, i32
  }
  func.func @transform_2(%arg0: i32, %arg1: i32) -> (i32, i32, i32) {
    %c0_i32 = arith.constant 0 : i32
    %c0_i32_0 = arith.constant 0 : i32
    %c0_i32_1 = arith.constant 0 : i32
    return %arg0, %c0_i32, %c0_i32_0 : i32, i32, i32
  }
}

</mosaic_0001>

<llo_original>
// kernel: tpu_custom_call.1
$region0: #{tpu_custom_call.1}
  #allocation0 [shape = 'u32[]', space=smem, size = 0x4, offset = 0x4, fixed_abs, tag = 'smem constant byte address 0x4 - core index']
  #allocation1 [shape = 'u32[144,128]{1,0:T(1,128)}', space=vmem, size = 0x12000, scoped, tag = 'internal scratch']
  #allocation2 [shape = 'f32[8,1]{1,0:T(8,128)}', space=vmem, size = 0x1000, scoped, tag = 'scratch operand']
  %s0 = inlined_call_operand.vmem [shape: f32[8,128], index: 0, kind: input, shape index: {}]
  %s1 = inlined_call_operand.vmem [shape: s32[8,1], index: 1, kind: input, shape index: {}]
  %s2 = inlined_call_operand.hbm [shape: f32[1,1,1], index: 2, kind: output, shape index: {}]
  %s3 = sld [smem:[#allocation0]]
  $region26: #{tpu_custom_call.1} parent=0
    _
  %s5 = ssub.s32 1, %s3
  %s6 = scalar_select 0, %s5, %s3
  $region1: #{tpu_custom_call.1} parent=0
    #allocation3 [shape = 'u8[512]{0}', space=vmem, size = 0x400, scoped, tag = 'output window, operand 0, single buffered']
    #allocation4 [shape = 's32[1]{0}', space=sflag, size = 0x4, scoped, tag = 'scoped memory for tpu_custom_call.1']
    %7 = vsyncpa [#allocation4], 0
    // Predicated region
    $region2: #{tpu_custom_call.1} parent=1 // pred_check
      _
    $region3: #{tpu_custom_call.1} parent=1 // pred_check_branch
      %9 = sbr.rel (0) target = $region5
    $region4: #{tpu_custom_call.1} parent=1 // pred_region
      %s10 = sadd.s32 0, 0
      %p11 = scmp.lt.s32.totalorder %s10, 0
      %s12 = scalar_select %p11, %s10, 0
      %p13 = scmp.lt.s32.totalorder %s12, 0
      %s14 = scalar_select %p13, %s12, 0
      %s15 = smul.addr %s14, 8
      %s16 = scalar_lea.vmem %s0, %s15
      %s17 = sadd.s32 0, 0
      %p18 = scmp.lt.s32.totalorder %s17, 0
      %s19 = scalar_select %p18, %s17, 0
    $region5: #{tpu_custom_call.1} parent=1 // pred_fallthru
      _
    // Predicated region
    $region6: #{tpu_custom_call.1} parent=1 // pred_check
      _
    $region7: #{tpu_custom_call.1} parent=1 // pred_check_branch
      %21 = sbr.rel (0) target = $region9
    $region8: #{tpu_custom_call.1} parent=1 // pred_region
      %s22 = sadd.s32 0, 0
      %p23 = scmp.lt.s32.totalorder %s22, 0
      %s24 = scalar_select %p23, %s22, 0
      %p25 = scmp.lt.s32.totalorder %s24, 0
      %s26 = scalar_select %p25, %s24, 0
      %s27 = smul.addr %s26, 8
      %s28 = scalar_lea.vmem %s1, %s27
      %s29 = sadd.s32 0, 0
      %p30 = scmp.lt.s32.totalorder %s29, 0
      %s31 = scalar_select %p30, %s29, 0
    $region9: #{tpu_custom_call.1} parent=1 // pred_fallthru
      _
    %s32 = sadd.s32 0, 0
    %p33 = scmp.lt.s32.totalorder %s32, 0
    %s34 = scalar_select %p33, %s32, 0
    %p35 = scmp.lt.s32.totalorder %s34, 0
    %s36 = scalar_select %p35, %s34, 0
    %s37 = smul.addr %s36, 8
    %s38 = scalar_lea.vmem %s0, %s37
    %s39 = sadd.s32 0, 0
    %p40 = scmp.lt.s32.totalorder %s39, 0
    %s41 = scalar_select %p40, %s39, 0
    %p42 = scmp.lt.s32.totalorder %s41, 0
    %s43 = scalar_select %p42, %s41, 0
    %s44 = smul.addr %s43, 8
    %s45 = scalar_lea.vmem %s1, %s44
    %s46 = sadd.s32 0, 0
    %p47 = scmp.lt.s32.totalorder %s46, 0
    %s48 = scalar_select %p47, %s46, 0
    %p49 = scmp.lt.s32.totalorder %s48, 0
    %s50 = scalar_select %p49, %s48, 0
    %s51 = smul.addr %s50, 8
    %s52 = scalar_lea.vmem %s0, %s51
    %s53 = sadd.s32 0, 0
    %p54 = scmp.lt.s32.totalorder %s53, 0
    %s55 = scalar_select %p54, %s53, 0
    %s56 = sadd.s32 0, 0
    %p57 = scmp.lt.s32.totalorder %s56, 0
    %s58 = scalar_select %p57, %s56, 0
    %p59 = scmp.lt.s32.totalorder %s58, 0
    %s60 = scalar_select %p59, %s58, 0
    %s61 = smul.addr %s60, 8
    %s62 = scalar_lea.vmem %s1, %s61
    %s63 = sadd.s32 0, 0
    %p64 = scmp.lt.s32.totalorder %s63, 0
    %s65 = scalar_select %p64, %s63, 0
    %p66 = scmp.eq.s32.totalorder 0, 0
    // Predicated region
    $region10: #{tpu_custom_call.1} parent=1 // pred_check
      %p67 = pneg %p66
    $region11: #{tpu_custom_call.1} parent=1 // pred_check_branch
      %69 = sbr.rel (%p67) target = $region13
    $region12: #{tpu_custom_call.1} parent=1 // pred_region
      %vm70 = vcmask 7168
      %71 = vst.msk [vmem:[#allocation2] sm:$0xff] %vm70, 0.0
    $region13: #{tpu_custom_call.1} parent=1 // pred_fallthru
      _
    %v72 = vld [vmem:[%s52] sm:$0xff]
    %v73 = vld [vmem:[%s62] sm:$0xff]
    %74 = vmax.xlane.f32.xlu0 %v72
    %v75 = vpop.xlane.xlu0 %74
    %v76 = vsub.f32 %v72, %v75
    %v77 = vmul.f32 %v76, 1.442695
    %v78 = vpow.pop %v77
    %79 = vmatprep.subr.mxu0 0.0
    %80 = vmatpush1.msra.mxu0 1.0
    %81 = vmatprep.subr.mxu0 0.0
    %82 = vmatpush1.msra.mxu0 1.0
    %83 = vmatprep.subr.mxu0 0.0
    %84 = vmatpush1.msra.mxu0 1.0
    %85 = vmatprep.subr.mxu0 0.0
    %86 = vmatpush1.msra.mxu0 1.0
    %87 = vmatprep.subr.mxu0 0.0
    %88 = vmatpush1.msra.mxu0 1.0
    %89 = vmatprep.subr.mxu0 0.0
    %90 = vmatpush1.msra.mxu0 1.0
    %91 = vmatprep.subr.mxu0 0.0
    %92 = vmatpush1.msra.mxu0 1.0
    %93 = vmatprep.subr.mxu0 0.0
    %94 = vmatpush1.msra.mxu0 1.0
    %95 = vmatprep.subr.mxu0 0.0
    %96 = vmatpush1.msra.mxu0 1.0
    %97 = vmatprep.subr.mxu0 0.0
    %98 = vmatpush1.msra.mxu0 1.0
    %99 = vmatprep.subr.mxu0 0.0
    %100 = vmatpush1.msra.mxu0 1.0
    %101 = vmatprep.subr.mxu0 0.0
    %102 = vmatpush1.msra.mxu0 1.0
    %103 = vmatprep.subr.mxu0 0.0
    %104 = vmatpush1.msra.mxu0 1.0
    %105 = vmatprep.subr.mxu0 0.0
    %106 = vmatpush1.msra.mxu0 1.0
    %107 = vmatprep.subr.mxu0 0.0
    %108 = vmatpush1.msra.mxu0 1.0
    %109 = vmatprep.subr.mxu0 0.0
    %110 = vmatpush1.msra.mxu0 1.0
    %111 = vmatprep.subr.mxu0 0.0
    %112 = vmatpush1.msra.mxu0 0.0
    %113 = vmatprep.subr.mxu0 0.0
    %114 = vmatpush1.msra.mxu0 0.0
    %115 = vmatprep.subr.mxu0 0.0
    %116 = vmatpush1.msra.mxu0 0.0
    %117 = vmatprep.subr.mxu0 0.0
    %118 = vmatpush1.msra.mxu0 0.0
    %119 = vmatprep.subr.mxu0 0.0
    %120 = vmatpush1.msra.mxu0 0.0
    %121 = vmatprep.subr.mxu0 0.0
    %122 = vmatpush1.msra.mxu0 0.0
    %123 = vmatprep.subr.mxu0 0.0
    %124 = vmatpush1.msra.mxu0 0.0
    %125 = vmatprep.subr.mxu0 0.0
    %126 = vmatpush1.msra.mxu0 0.0
    %127 = vmatprep.subr.mxu0 0.0
    %128 = vmatpush1.msra.mxu0 0.0
    %129 = vmatprep.subr.mxu0 0.0
    %130 = vmatpush1.msra.mxu0 0.0
    %131 = vmatprep.subr.mxu0 0.0
    %132 = vmatpush1.msra.mxu0 0.0
    %133 = vmatprep.subr.mxu0 0.0
    %134 = vmatpush1.msra.mxu0 0.0
    %135 = vmatprep.subr.mxu0 0.0
    %136 = vmatpush1.msra.mxu0 0.0
    %137 = vmatprep.subr.mxu0 0.0
    %138 = vmatpush1.msra.mxu0 0.0
    %139 = vmatprep.subr.mxu0 0.0
    %140 = vmatpush1.msra.mxu0 0.0
    %141 = vmatprep.subr.mxu0 0.0
    %142 = vmatpush1.msra.mxu0 0.0
    %143 = vmatprep.mubr.f32.mxu0 0.0
    %144 = vmatmul.mubr.f32.gmra.mrb[0].mxu0 %v78
    %v145 = vpop.f32.mrb[0].mxu0
    %v146 = vadd.f32 0.0, %v145
    %v147 = vpop.f32.mrb[0].mxu0
    %148 = vdwg.mxu0
    %v149 = vlaneseq
    %v150 = vand.u32 %v149, 127
    %151 = vset.pattern.permute.xlu0 0
    %152 = vperm.xlu0 %151, %v73
    %v153 = vpop.permute.xlu0 %152
    %vm154 = vcmp.eq.s32.totalorder %v150, %v153
    %v155 = vsel %vm154, 0.9007813, 0.00078125
    %v156 = vmul.f32 %v155, %v76
    %157 = vmatprep.subr.mxu0 0.0
    %158 = vmatpush1.msra.mxu0 1.0
    %159 = vmatprep.subr.mxu0 0.0
    %160 = vmatpush1.msra.mxu0 1.0
    %161 = vmatprep.subr.mxu0 0.0
    %162 = vmatpush1.msra.mxu0 1.0
    %163 = vmatprep.subr.mxu0 0.0
    %164 = vmatpush1.msra.mxu0 1.0
    %165 = vmatprep.subr.mxu0 0.0
    %166 = vmatpush1.msra.mxu0 1.0
    %167 = vmatprep.subr.mxu0 0.0
    %168 = vmatpush1.msra.mxu0 1.0
    %169 = vmatprep.subr.mxu0 0.0
    %170 = vmatpush1.msra.mxu0 1.0
    %171 = vmatprep.subr.mxu0 0.0
    %172 = vmatpush1.msra.mxu0 1.0
    %173 = vmatprep.subr.mxu0 0.0
    %174 = vmatpush1.msra.mxu0 1.0
    %175 = vmatprep.subr.mxu0 0.0
    %176 = vmatpush1.msra.mxu0 1.0
    %177 = vmatprep.subr.mxu0 0.0
    %178 = vmatpush1.msra.mxu0 1.0
    %179 = vmatprep.subr.mxu0 0.0
    %180 = vmatpush1.msra.mxu0 1.0
    %181 = vmatprep.subr.mxu0 0.0
    %182 = vmatpush1.msra.mxu0 1.0
    %183 = vmatprep.subr.mxu0 0.0
    %184 = vmatpush1.msra.mxu0 1.0
    %185 = vmatprep.subr.mxu0 0.0
    %186 = vmatpush1.msra.mxu0 1.0
    %187 = vmatprep.subr.mxu0 0.0
    %188 = vmatpush1.msra.mxu0 1.0
    %189 = vmatprep.subr.mxu0 0.0
    %190 = vmatpush1.msra.mxu0 0.0
    %191 = vmatprep.subr.mxu0 0.0
    %192 = vmatpush1.msra.mxu0 0.0
    %193 = vmatprep.subr.mxu0 0.0
    %194 = vmatpush1.msra.mxu0 0.0
    %195 = vmatprep.subr.mxu0 0.0
    %196 = vmatpush1.msra.mxu0 0.0
    %197 = vmatprep.subr.mxu0 0.0
    %198 = vmatpush1.msra.mxu0 0.0
    %199 = vmatprep.subr.mxu0 0.0
    %200 = vmatpush1.msra.mxu0 0.0
    %201 = vmatprep.subr.mxu0 0.0
    %202 = vmatpush1.msra.mxu0 0.0
    %203 = vmatprep.subr.mxu0 0.0
    %204 = vmatpush1.msra.mxu0 0.0
    %205 = vmatprep.subr.mxu0 0.0
    %206 = vmatpush1.msra.mxu0 0.0
    %207 = vmatprep.subr.mxu0 0.0
    %208 = vmatpush1.msra.mxu0 0.0
    %209 = vmatprep.subr.mxu0 0.0
    %210 = vmatpush1.msra.mxu0 0.0
    %211 = vmatprep.subr.mxu0 0.0
    %212 = vmatpush1.msra.mxu0 0.0
    %213 = vmatprep.subr.mxu0 0.0
    %214 = vmatpush1.msra.mxu0 0.0
    %215 = vmatprep.subr.mxu0 0.0
    %216 = vmatpush1.msra.mxu0 0.0
    %217 = vmatprep.subr.mxu0 0.0
    %218 = vmatpush1.msra.mxu0 0.0
    %219 = vmatprep.subr.mxu0 0.0
    %220 = vmatpush1.msra.mxu0 0.0
    %221 = vmatprep.mubr.f32.mxu0 0.0
    %222 = vmatmul.mubr.f32.gmra.mrb[0].mxu0 %v156
    %v223 = vpop.f32.mrb[0].mxu0
    %v224 = vadd.f32 0.0, %v223
    %v225 = vpop.f32.mrb[0].mxu0
    %226 = vdwg.mxu0
    %v227 = vlog2.pop %v146
    %v228 = vmul.f32 %v227, 0.6931472
    %v229 = vsub.f32 %v228, %v224
    %s230 = sadd.s32 0, 0
    %s231 = smul.u32 %s230, 8
    %v232 = vlaneseq
    %v233 = vshrl.u32 %v232, 7
    %v234 = vstv %s231
    %v235 = vadd.s32 %v234, %v233
    %v236 = vld [vmem:[#allocation2] sm:$0xff]
    %vm237 = vcmp.lt.s32.totalorder %v235, 8
    %v238 = vsel %vm237, %v229, 0.0
    %v239 = vadd.f32 %v236, %v238
    %vm240 = vcmask 7168
    %241 = vst.msk [vmem:[#allocation2] sm:$0xff] %vm240, %v239
    // Predicated region
    $region14: #{tpu_custom_call.1} parent=1 // pred_check
      %p242 = pneg %p66
    $region15: #{tpu_custom_call.1} parent=1 // pred_check_branch
      %244 = sbr.rel (%p242) target = $region17
    $region16: #{tpu_custom_call.1} parent=1 // pred_region
      %v245 = vld [vmem:[#allocation2] sm:$0xff]
      %v246 = vsel %vm240, %v245, 0.0
      %247 = vadd.xlane.f32.xlu0 %v246
      %v248 = vpop.xlane.xlu0 %247
      %v249 = vrot.slane %v248, 4
      %v250 = vadd.f32 %v248, %v249
      %v251 = vrot.slane %v250, 2
      %v252 = vadd.f32 %v250, %v251
      %v253 = vrot.slane %v252, 1
      %v254 = vadd.f32 %v252, %v253
      %s255 = vtos %v254
      %v256 = vstv %s255
      %vm257 = vcmask 0
      %258 = vst.msk [vmem:[#allocation3] sm:$0x1] %vm257, %v256
    $region17: #{tpu_custom_call.1} parent=1 // pred_fallthru
      _
    // Predicated region
    $region18: #{tpu_custom_call.1} parent=1 // pred_check
      _
    $region19: #{tpu_custom_call.1} parent=1 // pred_check_branch
      %260 = sbr.rel (0) target = $region21
    $region20: #{tpu_custom_call.1} parent=1 // pred_region
      %s262 = ssub.s32 16, 16
      %263 = vsyncadd [#allocation4], %s262
      %s265 = sshll.u32 [#allocation3], 4
      %s266 = int_to_ptr.vmem [resolvable:$true] %s265
      %268 = dma.vmem_to_hbm [thread:$0]  %s266, 16, %s2, [#allocation4]
    $region21: #{tpu_custom_call.1} parent=1 // pred_fallthru
      _
    // Predicated region
    $region22: #{tpu_custom_call.1} parent=1 // pred_check
      _
    $region23: #{tpu_custom_call.1} parent=1 // pred_check_branch
      %270 = sbr.rel (0) target = $region25
    $region24: #{tpu_custom_call.1} parent=1 // pred_region
      %271 = dma.done [#allocation4], 16
    $region25: #{tpu_custom_call.1} parent=1 // pred_fallthru
      _
    %272 = vsyncpa [#allocation4], 1

</llo_original>
